<compile_context>
chip_gen: v7x
topology: tpu7x:2x2x1
jax: 0.10.0
libtpu: 0.0.40
codegen_flags: <defaults>
</compile_context>

<pallas_src>
import numpy as np
import jax
import jax.numpy as jnp
from jax.experimental import pallas as pl
from jax.experimental.pallas import tpu as pltpu


# ------------------------------- helpers ---------------------------------- #
def _round_up(x, m):
    return ((x + m - 1) // m) * m


def _pad2(x, rows, cols):
    return jnp.pad(x, ((0, rows - x.shape[0]), (0, cols - x.shape[1])))


def _pick_dst_tile(n_dst_pad):
    for t in (256, 128, 64, 32, 16, 8):
        if n_dst_pad % t == 0:
            return t
    return n_dst_pad


def build_mean_adj(edge_index, n_src, n_dst):
    """Row-normalized dense adjacency: A[d, s] = (#edges s->d) / deg(d).
    Parallel edges are multi-counted, matching PyG multiset-mean semantics."""
    src, dst = edge_index
    A = jnp.zeros((n_dst, n_src), jnp.float32).at[dst, src].add(1.0)
    deg = A.sum(axis=1, keepdims=True)
    return A / jnp.maximum(deg, 1.0)


# ----------------------------- Pallas kernel ------------------------------ #
def _hetero_sage_kernel(a_ref, xs_ref, xd_ref, wlt_ref, wrt_ref, b_ref, out_ref):
    # a_ref:   (TM, NSRC)  bf16  normalized adjacency tile for edge type e
    # xs_ref:  (NSRC, F)   bf16  source-node features for edge type e
    # xd_ref:  (TM, F)     bf16  destination-node features (same for all e)
    # wlt_ref: (F, H)      bf16  lin_l weight, pre-transposed
    # wrt_ref: (F, H)      bf16  lin_r weight, pre-transposed
    # b_ref:   (1, H)      f32   lin_l bias
    # out_ref: (TM, H)     f32   HeteroConv('sum') accumulator (resident over e)
    e = pl.program_id(1)

    @pl.when(e == 0)
    def _():
        out_ref[...] = jnp.zeros_like(out_ref)

    # Mean neighbour aggregation on the MXU (f32 accumulate).
    agg = jnp.dot(a_ref[...], xs_ref[...], preferred_element_type=jnp.float32)
    # SAGEConv: lin_l(agg) + lin_r(x_dst); weights already [F, H] -> no .T.
    out_l = jnp.dot(agg.astype(wlt_ref.dtype), wlt_ref[...],
                    preferred_element_type=jnp.float32)
    out_r = jnp.dot(xd_ref[...], wrt_ref[...],
                    preferred_element_type=jnp.float32)
    out_ref[...] += out_l + out_r + b_ref[...]


def hetero_sage_pallas(A_stack, Xs_stack, x_dst_pad, WlT_stack, WrT_stack,
                       b_stack, n_dst, hidden):
    """Fused SAGEConv over all edge types feeding one destination node type,
    summed in-kernel (HeteroConv aggr='sum')."""
    E, n_dst_pad, n_src_pad = A_stack.shape
    F_pad = Xs_stack.shape[-1]
    H_pad = WlT_stack.shape[-1]
    tm = _pick_dst_tile(n_dst_pad)

    out_pad = pl.pallas_call(
        _hetero_sage_kernel,
        out_shape=jax.ShapeDtypeStruct((n_dst_pad, H_pad), jnp.float32),
        grid=(n_dst_pad // tm, E),
        in_specs=[
            pl.BlockSpec((None, tm, n_src_pad), lambda i, e: (e, i, 0)),
            pl.BlockSpec((None, n_src_pad, F_pad), lambda i, e: (e, 0, 0)),
            pl.BlockSpec((tm, F_pad), lambda i, e: (i, 0)),
            pl.BlockSpec((None, F_pad, H_pad), lambda i, e: (e, 0, 0)),
            pl.BlockSpec((None, F_pad, H_pad), lambda i, e: (e, 0, 0)),
            pl.BlockSpec((None, 1, H_pad), lambda i, e: (e, 0, 0)),
        ],
        out_specs=pl.BlockSpec((tm, H_pad), lambda i, e: (i, 0)),
        compiler_params=pltpu.CompilerParams(
            dimension_semantics=("parallel", "arbitrary")),
    )(A_stack, Xs_stack, x_dst_pad, WlT_stack, WrT_stack, b_stack)

    return out_pad[:n_dst, :hidden]


# ------------------------------ JAX glue ---------------------------------- #
def gnn_model_forward(x_dict, edge_index_dict, params, hidden):
    """HeteroConv({edge_type: SAGEConv}, aggr='sum') forward (Pallas)."""
    # Group edge types by destination node type -> one fused kernel per dst.
    by_dst = {}
    for et in edge_index_dict:
        by_dst.setdefault(et[2], []).append(et)

    F = next(iter(x_dict.values())).shape[1]
    F_pad = _round_up(F, 128)      # lane-dense feature axis
    H_pad = _round_up(hidden, 128)  # lane-dense output axis

    out_dict = {}
    for dst_t, ets in by_dst.items():
        n_dst = x_dict[dst_t].shape[0]
        n_dst_pad = _round_up(n_dst, 8)
        n_src_pad = _round_up(max(x_dict[et[0]].shape[0] for et in ets), 128)

        A_l, Xs_l, WlT_l, WrT_l, b_l_list = [], [], [], [], []
        for et in ets:
            src_t = et[0]
            x_src = x_dict[src_t]
            A = build_mean_adj(edge_index_dict[et], x_src.shape[0], n_dst)
            W_l, W_r, b_l = params[et]
            A_l.append(_pad2(A, n_dst_pad, n_src_pad))
            Xs_l.append(_pad2(x_src, n_src_pad, F_pad))
            WlT_l.append(_pad2(W_l.T, F_pad, H_pad))   # pre-transposed [F, H]
            WrT_l.append(_pad2(W_r.T, F_pad, H_pad))
            b_l_list.append(jnp.pad(b_l, (0, H_pad - hidden)).reshape(1, H_pad))

        A_stack = jnp.stack(A_l).astype(jnp.bfloat16)
        Xs_stack = jnp.stack(Xs_l).astype(jnp.bfloat16)
        WlT_stack = jnp.stack(WlT_l).astype(jnp.bfloat16)
        WrT_stack = jnp.stack(WrT_l).astype(jnp.bfloat16)
        b_stack = jnp.stack(b_l_list).astype(jnp.float32)
        x_dst_pad = _pad2(x_dict[dst_t], n_dst_pad, F_pad).astype(jnp.bfloat16)

        out_dict[dst_t] = hetero_sage_pallas(
            A_stack, Xs_stack, x_dst_pad, WlT_stack, WrT_stack, b_stack,
            n_dst, hidden)
    return out_dict


def gnn_model_forward_ref(x_dict, edge_index_dict, params):
    """Pure-JAX f32 reference for correctness check."""
    out_dict = {}
    for edge_type, edge_index in edge_index_dict.items():
        src_t, _, dst_t = edge_type
        x_src, x_dst = x_dict[src_t], x_dict[dst_t]
        A = build_mean_adj(edge_index, x_src.shape[0], x_dst.shape[0])
        W_l, W_r, b_l = params[edge_type]
        out = (A @ x_src) @ W_l.T + x_dst @ W_r.T + b_l[None, :]
        out_dict[dst_t] = out if dst_t not in out_dict else out_dict[dst_t] + out
    return out_dict


# --------------------------------- main ------------------------------------ #
if __name__ == "__main__":
    key = jax.random.PRNGKey(0)

    # Synthetic HeteroData: two node types, three edge types.
    FEAT = 32            # data[node_type].x.size(-1) (same for all types)
    HIDDEN = 32          # hidden_channels
    num_nodes = {"user": 16, "item": 16}
    num_edges = {
        ("user", "rates", "item"): 64,
        ("item", "rev_rates", "user"): 64,
        ("user", "follows", "user"): 32,
    }

    n_keys = len(num_nodes) + 2 * len(num_edges) + 3 * len(num_edges)
    keys = jax.random.split(key, n_keys)
    ki = iter(keys)

    x_dict = {
        nt: jax.random.normal(next(ki), (n, FEAT), jnp.float32)
        for nt, n in num_nodes.items()
    }

    edge_index_dict = {}
    for et, ne in num_edges.items():
        src_t, _, dst_t = et
        src = jax.random.randint(next(ki), (ne,), 0, num_nodes[src_t])
        dst = jax.random.randint(next(ki), (ne,), 0, num_nodes[dst_t])
        edge_index_dict[et] = (src, dst)

    # Deterministic SAGEConv parameters per edge type:
    #   lin_l: [HIDDEN, FEAT] + bias [HIDDEN];  lin_r: [HIDDEN, FEAT] (no bias).
    params = {}
    for et in num_edges:
        W_l = 0.1 * jax.random.normal(next(ki), (HIDDEN, FEAT), jnp.float32)
        W_r = 0.1 * jax.random.normal(next(ki), (HIDDEN, FEAT), jnp.float32)
        b_l = 0.01 * jax.random.normal(next(ki), (HIDDEN,), jnp.float32)
        params[et] = (W_l, W_r, b_l)

    out = gnn_model_forward(x_dict, edge_index_dict, params, HIDDEN)
    out = jax.tree_util.tree_map(jax.block_until_ready, out)

    ref = gnn_model_forward_ref(x_dict, edge_index_dict, params)
    for nt in ref:
        np.testing.assert_allclose(np.asarray(out[nt]), np.asarray(ref[nt]),
                                   rtol=2e-2, atol=2e-2)  # bf16 inputs, f32 acc

    print("KERNEL_OK")
</pallas_src>

<mosaic_0001>
module attributes {stable_mosaic.version = 11 : i64} {
  func.func @_hetero_sage_kernel(%arg0: i32, %arg1: i32, %arg2: memref<1x16x128xbf16, #tpu.memory_space<vmem>>, %arg3: memref<1x128x128xbf16, #tpu.memory_space<vmem>>, %arg4: memref<16x128xbf16, #tpu.memory_space<vmem>>, %arg5: memref<1x128x128xbf16, #tpu.memory_space<vmem>>, %arg6: memref<1x128x128xbf16, #tpu.memory_space<vmem>>, %arg7: memref<1x1x128xf32, #tpu.memory_space<vmem>>, %arg8: memref<16x128xf32, #tpu.memory_space<vmem>>) attributes {dimension_semantics = [#tpu.dimension_semantics<parallel>, #tpu.dimension_semantics<arbitrary>], iteration_bounds = array<i64: 1, 1>, scalar_prefetch = 0 : i64, scratch_operands = 0 : i64, tpu.core_type = #tpu.core_type<tc>, window_params = [{transform_indices = @transform_0, window_bounds = array<i64: 1, 16, 128>}, {transform_indices = @transform_1, window_bounds = array<i64: 1, 128, 128>}, {transform_indices = @transform_2, window_bounds = array<i64: 16, 128>}, {transform_indices = @transform_3, window_bounds = array<i64: 1, 128, 128>}, {transform_indices = @transform_4, window_bounds = array<i64: 1, 128, 128>}, {transform_indices = @transform_5, window_bounds = array<i64: 1, 1, 128>}, {transform_indices = @transform_6, window_bounds = array<i64: 16, 128>}]} {
    %c0_i32 = arith.constant 0 : i32
    %0 = arith.cmpi eq, %arg1, %c0_i32 : i32
    %1 = arith.extui %0 : i1 to i32
    %c0_i32_0 = arith.constant 0 : i32
    %2 = arith.cmpi ne, %1, %c0_i32_0 : i32
    scf.if %2 {
      %cst_23 = arith.constant 0.000000e+00 : f32
      %24 = vector.broadcast %cst_23 : f32 to vector<16x128xf32>
      %c0_24 = arith.constant 0 : index
      %c0_25 = arith.constant 0 : index
      %25 = vector.load %arg8[%c0_24, %c0_25] : memref<16x128xf32, #tpu.memory_space<vmem>>, vector<16x128xf32>
      tpu.vector_store %arg8[%c0_24, %c0_25], %24 {strides = array<i32>} : memref<16x128xf32, #tpu.memory_space<vmem>>, vector<16x128xf32>,
    } else {
    }
    %c0 = arith.constant 0 : index
    %c0_1 = arith.constant 0 : index
    %c0_2 = arith.constant 0 : index
    %3 = vector.load %arg2[%c0, %c0_1, %c0_2] : memref<1x16x128xbf16, #tpu.memory_space<vmem>>, vector<1x16x128xbf16>
    %4 = vector.shape_cast %3 : vector<1x16x128xbf16> to vector<16x128xbf16>
    %c0_3 = arith.constant 0 : index
    %c0_4 = arith.constant 0 : index
    %c0_5 = arith.constant 0 : index
    %5 = vector.load %arg3[%c0_3, %c0_4, %c0_5] : memref<1x128x128xbf16, #tpu.memory_space<vmem>>, vector<1x128x128xbf16>
    %6 = vector.shape_cast %5 : vector<1x128x128xbf16> to vector<128x128xbf16>
    %cst = arith.constant dense<0.000000e+00> : vector<16x128xf32>
    %7 = tpu.matmul %4, %6, %cst {dimension_numbers = #tpu.dot_dimension_numbers<[1], [0], [0], [1], [0, 0, 1, 1], [], []>} : vector<16x128xbf16>, vector<128x128xbf16>, vector<16x128xf32> -> vector<16x128xf32>
    %8 = arith.truncf %7 : vector<16x128xf32> to vector<16x128xbf16>
    %c0_6 = arith.constant 0 : index
    %c0_7 = arith.constant 0 : index
    %c0_8 = arith.constant 0 : index
    %9 = vector.load %arg5[%c0_6, %c0_7, %c0_8] : memref<1x128x128xbf16, #tpu.memory_space<vmem>>, vector<1x128x128xbf16>
    %10 = vector.shape_cast %9 : vector<1x128x128xbf16> to vector<128x128xbf16>
    %cst_9 = arith.constant dense<0.000000e+00> : vector<16x128xf32>
    %11 = tpu.matmul %8, %10, %cst_9 {dimension_numbers = #tpu.dot_dimension_numbers<[1], [0], [0], [1], [0, 0, 1, 1], [], []>} : vector<16x128xbf16>, vector<128x128xbf16>, vector<16x128xf32> -> vector<16x128xf32>
    %c0_10 = arith.constant 0 : index
    %c0_11 = arith.constant 0 : index
    %12 = vector.load %arg4[%c0_10, %c0_11] : memref<16x128xbf16, #tpu.memory_space<vmem>>, vector<16x128xbf16>
    %c0_12 = arith.constant 0 : index
    %c0_13 = arith.constant 0 : index
    %c0_14 = arith.constant 0 : index
    %13 = vector.load %arg6[%c0_12, %c0_13, %c0_14] : memref<1x128x128xbf16, #tpu.memory_space<vmem>>, vector<1x128x128xbf16>
    %14 = vector.shape_cast %13 : vector<1x128x128xbf16> to vector<128x128xbf16>
    %cst_15 = arith.constant dense<0.000000e+00> : vector<16x128xf32>
    %15 = tpu.matmul %12, %14, %cst_15 {dimension_numbers = #tpu.dot_dimension_numbers<[1], [0], [0], [1], [0, 0, 1, 1], [], []>} : vector<16x128xbf16>, vector<128x128xbf16>, vector<16x128xf32> -> vector<16x128xf32>
    %c0_16 = arith.constant 0 : index
    %c0_17 = arith.constant 0 : index
    %16 = vector.load %arg8[%c0_16, %c0_17] : memref<16x128xf32, #tpu.memory_space<vmem>>, vector<16x128xf32>
    %17 = arith.addf %11, %15 : vector<16x128xf32>
    %c0_18 = arith.constant 0 : index
    %c0_19 = arith.constant 0 : index
    %c0_20 = arith.constant 0 : index
    %18 = vector.load %arg7[%c0_18, %c0_19, %c0_20] : memref<1x1x128xf32, #tpu.memory_space<vmem>>, vector<1x1x128xf32>
    %19 = vector.shape_cast %18 : vector<1x1x128xf32> to vector<1x128xf32>
    %20 = vector.broadcast %19 : vector<1x128xf32> to vector<16x128xf32>
    %21 = arith.addf %17, %20 : vector<16x128xf32>
    %22 = arith.addf %16, %21 : vector<16x128xf32>
    %c0_21 = arith.constant 0 : index
    %c0_22 = arith.constant 0 : index
    %23 = vector.load %arg8[%c0_21, %c0_22] : memref<16x128xf32, #tpu.memory_space<vmem>>, vector<16x128xf32>
    tpu.vector_store %arg8[%c0_21, %c0_22], %22 {strides = array<i32>} : memref<16x128xf32, #tpu.memory_space<vmem>>, vector<16x128xf32>,
    return
  }
  func.func @transform_0(%arg0: i32, %arg1: i32) -> (i32, i32, i32) {
    %c0_i32 = arith.constant 0 : i32
    %c0_i32_0 = arith.constant 0 : i32
    return %arg1, %arg0, %c0_i32 : i32, i32, i32
  }
  func.func @transform_1(%arg0: i32, %arg1: i32) -> (i32, i32, i32) {
    %c0_i32 = arith.constant 0 : i32
    %c0_i32_0 = arith.constant 0 : i32
    %c0_i32_1 = arith.constant 0 : i32
    return %arg1, %c0_i32, %c0_i32_0 : i32, i32, i32
  }
  func.func @transform_2(%arg0: i32, %arg1: i32) -> (i32, i32) {
    %c0_i32 = arith.constant 0 : i32
    %c0_i32_0 = arith.constant 0 : i32
    return %arg0, %c0_i32 : i32, i32
  }
  func.func @transform_3(%arg0: i32, %arg1: i32) -> (i32, i32, i32) {
    %c0_i32 = arith.constant 0 : i32
    %c0_i32_0 = arith.constant 0 : i32
    %c0_i32_1 = arith.constant 0 : i32
    return %arg1, %c0_i32, %c0_i32_0 : i32, i32, i32
  }
  func.func @transform_4(%arg0: i32, %arg1: i32) -> (i32, i32, i32) {
    %c0_i32 = arith.constant 0 : i32
    %c0_i32_0 = arith.constant 0 : i32
    %c0_i32_1 = arith.constant 0 : i32
    return %arg1, %c0_i32, %c0_i32_0 : i32, i32, i32
  }
  func.func @transform_5(%arg0: i32, %arg1: i32) -> (i32, i32, i32) {
    %c0_i32 = arith.constant 0 : i32
    %c0_i32_0 = arith.constant 0 : i32
    %c0_i32_1 = arith.constant 0 : i32
    return %arg1, %c0_i32, %c0_i32_0 : i32, i32, i32
  }
  func.func @transform_6(%arg0: i32, %arg1: i32) -> (i32, i32) {
    %c0_i32 = arith.constant 0 : i32
    %c0_i32_0 = arith.constant 0 : i32
    return %arg0, %c0_i32 : i32, i32
  }
}

</mosaic_0001>

<llo_original>
// kernel: tpu_custom_call.1
$region0: #{tpu_custom_call.1}
  #allocation0 [shape = 'u32[]', space=smem, size = 0x4, offset = 0x4, fixed_abs, tag = 'smem constant byte address 0x4 - core index']
  #allocation1 [shape = 'u32[144,128]{1,0:T(1,128)}', space=vmem, size = 0x12000, scoped, tag = 'internal scratch']
  %s0 = inlined_call_operand.hbm [shape: bf16[1,16,128], index: 0, kind: input, shape index: {}]
  %s1 = inlined_call_operand.hbm [shape: bf16[1,128,128], index: 1, kind: input, shape index: {}]
  %s2 = inlined_call_operand.hbm [shape: bf16[16,128], index: 2, kind: input, shape index: {}]
  %s3 = inlined_call_operand.hbm [shape: bf16[1,128,128], index: 3, kind: input, shape index: {}]
  %s4 = inlined_call_operand.hbm [shape: bf16[1,128,128], index: 4, kind: input, shape index: {}]
  %s5 = inlined_call_operand.vmem [shape: f32[1,1,128], index: 5, kind: input, shape index: {}]
  %s6 = inlined_call_operand.hbm [shape: f32[16,128], index: 6, kind: output, shape index: {}]
  %s7 = sld [smem:[#allocation0]]
  $region58: #{tpu_custom_call.1} parent=0
    _
  %s9 = ssub.s32 1, %s7
  %s10 = scalar_select 0, %s9, %s7
  $region1: #{tpu_custom_call.1} parent=0
    #allocation2 [shape = 'u8[4096]{0}', space=vmem, size = 0x1000, scoped, tag = 'input window, operand 0, single buffered']
    #allocation3 [shape = 's32[1]{0}', space=sflag, size = 0x4, scoped, tag = 'scoped memory for tpu_custom_call.1']
    #allocation4 [shape = 's32[1]{0}', space=sflag, size = 0x4, scoped, tag = 'scoped memory for tpu_custom_call.1']
    #allocation5 [shape = 'u8[32768]{0}', space=vmem, size = 0x8000, scoped, tag = 'input window, operand 1, single buffered']
    #allocation6 [shape = 's32[1]{0}', space=sflag, size = 0x4, scoped, tag = 'scoped memory for tpu_custom_call.1']
    #allocation7 [shape = 'u8[4096]{0}', space=vmem, size = 0x1000, scoped, tag = 'input window, operand 2, single buffered']
    #allocation8 [shape = 'u8[32768]{0}', space=vmem, size = 0x8000, scoped, tag = 'input window, operand 3, single buffered']
    #allocation9 [shape = 's32[1]{0}', space=sflag, size = 0x4, scoped, tag = 'scoped memory for tpu_custom_call.1']
    #allocation10 [shape = 'u8[32768]{0}', space=vmem, size = 0x8000, scoped, tag = 'input window, operand 4, single buffered']
    #allocation11 [shape = 'u8[8192]{0}', space=vmem, size = 0x2000, scoped, tag = 'output window, operand 0, single buffered']
    %11 = vsyncpa [#allocation3], 0
    %12 = vsyncpa [#allocation6], 0
    %13 = vsyncpa [#allocation9], 0
    %14 = vsyncpa [#allocation4], 0
    // Predicated region
    $region2: #{tpu_custom_call.1} parent=1 // pred_check
      _
    $region3: #{tpu_custom_call.1} parent=1 // pred_check_branch
      %16 = sbr.rel (0) target = $region5
    $region4: #{tpu_custom_call.1} parent=1 // pred_region
      %s18 = ssub.s32 128, 128
      %19 = vsyncadd [#allocation3], %s18
      %s20 = sshll.u32 [#allocation2], 4
      %s21 = int_to_ptr.vmem [resolvable:$true] %s20
      %26 = dma.hbm_to_vmem [thread:$0]  %s0, 128, %s21, [#allocation3], 64, 64, 4
    $region5: #{tpu_custom_call.1} parent=1 // pred_fallthru
      _
    // Predicated region
    $region6: #{tpu_custom_call.1} parent=1 // pred_check
      _
    $region7: #{tpu_custom_call.1} parent=1 // pred_check_branch
      %28 = sbr.rel (0) target = $region9
    $region8: #{tpu_custom_call.1} parent=1 // pred_region
      %s30 = ssub.s32 1024, 1024
      %31 = vsyncadd [#allocation6], %s30
      %s32 = sshll.u32 [#allocation5], 4
      %s33 = int_to_ptr.vmem [resolvable:$true] %s32
      %38 = dma.hbm_to_vmem [thread:$0]  %s1, 1024, %s33, [#allocation6], 64, 64, 4
    $region9: #{tpu_custom_call.1} parent=1 // pred_fallthru
      _
    // Predicated region
    $region10: #{tpu_custom_call.1} parent=1 // pred_check
      _
    $region11: #{tpu_custom_call.1} parent=1 // pred_check_branch
      %40 = sbr.rel (0) target = $region13
    $region12: #{tpu_custom_call.1} parent=1 // pred_region
      %s42 = ssub.s32 128, 128
      %43 = vsyncadd [#allocation6], %s42
      %s44 = sshll.u32 [#allocation7], 4
      %s45 = int_to_ptr.vmem [resolvable:$true] %s44
      %50 = dma.hbm_to_vmem [thread:$0]  %s2, 128, %s45, [#allocation6], 64, 64, 4
    $region13: #{tpu_custom_call.1} parent=1 // pred_fallthru
      _
    // Predicated region
    $region14: #{tpu_custom_call.1} parent=1 // pred_check
      _
    $region15: #{tpu_custom_call.1} parent=1 // pred_check_branch
      %52 = sbr.rel (0) target = $region17
    $region16: #{tpu_custom_call.1} parent=1 // pred_region
      %s54 = ssub.s32 1024, 1024
      %55 = vsyncadd [#allocation9], %s54
      %s56 = sshll.u32 [#allocation8], 4
      %s57 = int_to_ptr.vmem [resolvable:$true] %s56
      %62 = dma.hbm_to_vmem [thread:$0]  %s3, 1024, %s57, [#allocation9], 64, 64, 4
    $region17: #{tpu_custom_call.1} parent=1 // pred_fallthru
      _
    // Predicated region
    $region18: #{tpu_custom_call.1} parent=1 // pred_check
      _
    $region19: #{tpu_custom_call.1} parent=1 // pred_check_branch
      %64 = sbr.rel (0) target = $region21
    $region20: #{tpu_custom_call.1} parent=1 // pred_region
      %s66 = ssub.s32 1024, 1024
      %67 = vsyncadd [#allocation9], %s66
      %s68 = sshll.u32 [#allocation10], 4
      %s69 = int_to_ptr.vmem [resolvable:$true] %s68
      %74 = dma.hbm_to_vmem [thread:$0]  %s4, 1024, %s69, [#allocation9], 64, 64, 4
    $region21: #{tpu_custom_call.1} parent=1 // pred_fallthru
      _
    // Predicated region
    $region22: #{tpu_custom_call.1} parent=1 // pred_check
      _
    $region23: #{tpu_custom_call.1} parent=1 // pred_check_branch
      %76 = sbr.rel (0) target = $region25
    $region24: #{tpu_custom_call.1} parent=1 // pred_region
      _
    $region25: #{tpu_custom_call.1} parent=1 // pred_fallthru
      _
    // Predicated region
    $region26: #{tpu_custom_call.1} parent=1 // pred_check
      _
    $region27: #{tpu_custom_call.1} parent=1 // pred_check_branch
      %78 = sbr.rel (0) target = $region29
    $region28: #{tpu_custom_call.1} parent=1 // pred_region
      %79 = dma.done [#allocation3], 128
    $region29: #{tpu_custom_call.1} parent=1 // pred_fallthru
      _
    // Predicated region
    $region30: #{tpu_custom_call.1} parent=1 // pred_check
      _
    $region31: #{tpu_custom_call.1} parent=1 // pred_check_branch
      %81 = sbr.rel (0) target = $region33
    $region32: #{tpu_custom_call.1} parent=1 // pred_region
      %82 = dma.done [#allocation6], 1024
    $region33: #{tpu_custom_call.1} parent=1 // pred_fallthru
      _
    // Predicated region
    $region34: #{tpu_custom_call.1} parent=1 // pred_check
      _
    $region35: #{tpu_custom_call.1} parent=1 // pred_check_branch
      %84 = sbr.rel (0) target = $region37
    $region36: #{tpu_custom_call.1} parent=1 // pred_region
      %85 = dma.done [#allocation6], 128
    $region37: #{tpu_custom_call.1} parent=1 // pred_fallthru
      _
    // Predicated region
    $region38: #{tpu_custom_call.1} parent=1 // pred_check
      _
    $region39: #{tpu_custom_call.1} parent=1 // pred_check_branch
      %87 = sbr.rel (0) target = $region41
    $region40: #{tpu_custom_call.1} parent=1 // pred_region
      %88 = dma.done [#allocation9], 1024
    $region41: #{tpu_custom_call.1} parent=1 // pred_fallthru
      _
    // Predicated region
    $region42: #{tpu_custom_call.1} parent=1 // pred_check
      _
    $region43: #{tpu_custom_call.1} parent=1 // pred_check_branch
      %90 = sbr.rel (0) target = $region45
    $region44: #{tpu_custom_call.1} parent=1 // pred_region
      %91 = dma.done [#allocation9], 1024
    $region45: #{tpu_custom_call.1} parent=1 // pred_fallthru
      _
    %p93 = scmp.eq.s32.totalorder 0, 0
    // Predicated region
    $region46: #{tpu_custom_call.1} parent=1 // pred_check
      %p94 = pneg %p93
    $region47: #{tpu_custom_call.1} parent=1 // pred_check_branch
      %96 = sbr.rel (%p94) target = $region49
    $region48: #{tpu_custom_call.1} parent=1 // pred_region
      %97 = vst [vmem:[#allocation11] sm:$0xff] 0.0
      %98 = vst [vmem:[#allocation11 + $0x8] sm:$0xff] 0.0
    $region49: #{tpu_custom_call.1} parent=1 // pred_fallthru
      _
    %v99 = vld [vmem:[#allocation2] sm:$0xf]
    %v100 = vld [vmem:[#allocation2 + $0x4] sm:$0xf]
    %v101 = vld [vmem:[#allocation5] sm:$0xf]
    %v102 = vld [vmem:[#allocation5 + $0x4] sm:$0xf]
    %v103 = vld [vmem:[#allocation5 + $0x8] sm:$0xf]
    %v104 = vld [vmem:[#allocation5 + $0xc] sm:$0xf]
    %v105 = vld [vmem:[#allocation5 + $0x10] sm:$0xf]
    %v106 = vld [vmem:[#allocation5 + $0x14] sm:$0xf]
    %v107 = vld [vmem:[#allocation5 + $0x18] sm:$0xf]
    %v108 = vld [vmem:[#allocation5 + $0x1c] sm:$0xf]
    %v109 = vld [vmem:[#allocation5 + $0x20] sm:$0xf]
    %v110 = vld [vmem:[#allocation5 + $0x24] sm:$0xf]
    %v111 = vld [vmem:[#allocation5 + $0x28] sm:$0xf]
    %v112 = vld [vmem:[#allocation5 + $0x2c] sm:$0xf]
    %v113 = vld [vmem:[#allocation5 + $0x30] sm:$0xf]
    %v114 = vld [vmem:[#allocation5 + $0x34] sm:$0xf]
    %v115 = vld [vmem:[#allocation5 + $0x38] sm:$0xf]
    %v116 = vld [vmem:[#allocation5 + $0x3c] sm:$0xf]
    %v119 = vunpack.c.l.b16 %v99
    %v120 = vunpack.c.l.b16 %v100
    %v121 = vpack.c.b16 %v120, %v119
    %v139 = vunpack.c.l.b16 %v101
    %v140 = vunpack.c.l.b16 %v102
    %v141 = vunpack.c.l.b16 %v103
    %v142 = vunpack.c.l.b16 %v104
    %v143 = vunpack.c.l.b16 %v105
    %v144 = vunpack.c.l.b16 %v106
    %v145 = vunpack.c.l.b16 %v107
    %v146 = vunpack.c.l.b16 %v108
    %v147 = vunpack.c.l.b16 %v109
    %v148 = vunpack.c.l.b16 %v110
    %v149 = vunpack.c.l.b16 %v111
    %v150 = vunpack.c.l.b16 %v112
    %v151 = vunpack.c.l.b16 %v113
    %v152 = vunpack.c.l.b16 %v114
    %v153 = vunpack.c.l.b16 %v115
    %v154 = vunpack.c.l.b16 %v116
    %v155 = vpack.c.b16 %v140, %v139
    %v156 = vpack.c.b16 %v142, %v141
    %v157 = vpack.c.b16 %v144, %v143
    %v158 = vpack.c.b16 %v146, %v145
    %v159 = vpack.c.b16 %v148, %v147
    %v160 = vpack.c.b16 %v150, %v149
    %v161 = vpack.c.b16 %v152, %v151
    %v162 = vpack.c.b16 %v154, %v153
    %171 = vmatprep.subr.bf16.mxu0 0
    %172 = vmatpush1.bf16.msra.mxu0 %v155
    %173 = vmatprep.subr.bf16.mxu0 0
    %174 = vmatpush1.bf16.msra.mxu0 %v156
    %175 = vmatprep.subr.bf16.mxu0 0
    %176 = vmatpush1.bf16.msra.mxu0 %v157
    %177 = vmatprep.subr.bf16.mxu0 0
    %178 = vmatpush1.bf16.msra.mxu0 %v158
    %179 = vmatprep.subr.bf16.mxu0 0
    %180 = vmatpush1.bf16.msra.mxu0 %v159
    %181 = vmatprep.subr.bf16.mxu0 0
    %182 = vmatpush1.bf16.msra.mxu0 %v160
    %183 = vmatprep.subr.bf16.mxu0 0
    %184 = vmatpush1.bf16.msra.mxu0 %v161
    %185 = vmatprep.subr.bf16.mxu0 0
    %186 = vmatpush1.bf16.msra.mxu0 %v162
    %187 = vmatprep.subr.bf16.mxu0 0
    %188 = vmatpush1.bf16.msra.mxu0 0
    %189 = vmatprep.subr.bf16.mxu0 0
    %190 = vmatpush1.bf16.msra.mxu0 0
    %191 = vmatprep.subr.bf16.mxu0 0
    %192 = vmatpush1.bf16.msra.mxu0 0
    %193 = vmatprep.subr.bf16.mxu0 0
    %194 = vmatpush1.bf16.msra.mxu0 0
    %195 = vmatprep.subr.bf16.mxu0 0
    %196 = vmatpush1.bf16.msra.mxu0 0
    %197 = vmatprep.subr.bf16.mxu0 0
    %198 = vmatpush1.bf16.msra.mxu0 0
    %199 = vmatprep.subr.bf16.mxu0 0
    %200 = vmatpush1.bf16.msra.mxu0 0
    %201 = vmatprep.subr.bf16.mxu0 0
    %202 = vmatpush1.bf16.msra.mxu0 0
    %203 = vmatprep.mubr.bf16.mxu0 0
    %204 = vmatmul.mubr.bf16.gmra.mrb[0].mxu0 %v121
    %v205 = vpop.f32.mrb[0].mxu0
    %v206 = vadd.f32 0.0, %v205
    %v207 = vpop.f32.mrb[0].mxu0
    %v208 = vpop.f32.mrb[0].mxu0
    %v209 = vadd.f32 0.0, %v208
    %v210 = vpop.f32.mrb[0].mxu0
    %211 = vdwg.mxu0
    %v212 = vpack.c.bf16 %v209, %v206
    %v213 = vld [vmem:[#allocation8] sm:$0xf]
    %v214 = vld [vmem:[#allocation8 + $0x4] sm:$0xf]
    %v215 = vld [vmem:[#allocation8 + $0x8] sm:$0xf]
    %v216 = vld [vmem:[#allocation8 + $0xc] sm:$0xf]
    %v217 = vld [vmem:[#allocation8 + $0x10] sm:$0xf]
    %v218 = vld [vmem:[#allocation8 + $0x14] sm:$0xf]
    %v219 = vld [vmem:[#allocation8 + $0x18] sm:$0xf]
    %v220 = vld [vmem:[#allocation8 + $0x1c] sm:$0xf]
    %v221 = vld [vmem:[#allocation8 + $0x20] sm:$0xf]
    %v222 = vld [vmem:[#allocation8 + $0x24] sm:$0xf]
    %v223 = vld [vmem:[#allocation8 + $0x28] sm:$0xf]
    %v224 = vld [vmem:[#allocation8 + $0x2c] sm:$0xf]
    %v225 = vld [vmem:[#allocation8 + $0x30] sm:$0xf]
    %v226 = vld [vmem:[#allocation8 + $0x34] sm:$0xf]
    %v227 = vld [vmem:[#allocation8 + $0x38] sm:$0xf]
    %v228 = vld [vmem:[#allocation8 + $0x3c] sm:$0xf]
    %v229 = vld [vmem:[#allocation7] sm:$0xf]
    %v230 = vld [vmem:[#allocation7 + $0x4] sm:$0xf]
    %v231 = vld [vmem:[#allocation10] sm:$0xf]
    %v232 = vld [vmem:[#allocation10 + $0x4] sm:$0xf]
    %v233 = vld [vmem:[#allocation10 + $0x8] sm:$0xf]
    %v234 = vld [vmem:[#allocation10 + $0xc] sm:$0xf]
    %v235 = vld [vmem:[#allocation10 + $0x10] sm:$0xf]
    %v236 = vld [vmem:[#allocation10 + $0x14] sm:$0xf]
    %v237 = vld [vmem:[#allocation10 + $0x18] sm:$0xf]
    %v238 = vld [vmem:[#allocation10 + $0x1c] sm:$0xf]
    %v239 = vld [vmem:[#allocation10 + $0x20] sm:$0xf]
    %v240 = vld [vmem:[#allocation10 + $0x24] sm:$0xf]
    %v241 = vld [vmem:[#allocation10 + $0x28] sm:$0xf]
    %v242 = vld [vmem:[#allocation10 + $0x2c] sm:$0xf]
    %v243 = vld [vmem:[#allocation10 + $0x30] sm:$0xf]
    %v244 = vld [vmem:[#allocation10 + $0x34] sm:$0xf]
    %v245 = vld [vmem:[#allocation10 + $0x38] sm:$0xf]
    %v246 = vld [vmem:[#allocation10 + $0x3c] sm:$0xf]
    %v249 = vunpack.c.l.b16 %v229
    %v250 = vunpack.c.l.b16 %v230
    %v251 = vpack.c.b16 %v250, %v249
    %v269 = vunpack.c.l.b16 %v231
    %v270 = vunpack.c.l.b16 %v232
    %v271 = vunpack.c.l.b16 %v233
    %v272 = vunpack.c.l.b16 %v234
    %v273 = vunpack.c.l.b16 %v235
    %v274 = vunpack.c.l.b16 %v236
    %v275 = vunpack.c.l.b16 %v237
    %v276 = vunpack.c.l.b16 %v238
    %v277 = vunpack.c.l.b16 %v239
    %v278 = vunpack.c.l.b16 %v240
    %v279 = vunpack.c.l.b16 %v241
    %v280 = vunpack.c.l.b16 %v242
    %v281 = vunpack.c.l.b16 %v243
    %v282 = vunpack.c.l.b16 %v244
    %v283 = vunpack.c.l.b16 %v245
    %v284 = vunpack.c.l.b16 %v246
    %v285 = vpack.c.b16 %v270, %v269
    %v286 = vpack.c.b16 %v272, %v271
    %v287 = vpack.c.b16 %v274, %v273
    %v288 = vpack.c.b16 %v276, %v275
    %v289 = vpack.c.b16 %v278, %v277
    %v290 = vpack.c.b16 %v280, %v279
    %v291 = vpack.c.b16 %v282, %v281
    %v292 = vpack.c.b16 %v284, %v283
    %301 = vmatprep.subr.bf16.mxu0 0
    %302 = vmatpush1.bf16.msra.mxu0 %v285
    %303 = vmatprep.subr.bf16.mxu0 0
    %304 = vmatpush1.bf16.msra.mxu0 %v286
    %305 = vmatprep.subr.bf16.mxu0 0
    %306 = vmatpush1.bf16.msra.mxu0 %v287
    %307 = vmatprep.subr.bf16.mxu0 0
    %308 = vmatpush1.bf16.msra.mxu0 %v288
    %309 = vmatprep.subr.bf16.mxu0 0
    %310 = vmatpush1.bf16.msra.mxu0 %v289
    %311 = vmatprep.subr.bf16.mxu0 0
    %312 = vmatpush1.bf16.msra.mxu0 %v290
    %313 = vmatprep.subr.bf16.mxu0 0
    %314 = vmatpush1.bf16.msra.mxu0 %v291
    %315 = vmatprep.subr.bf16.mxu0 0
    %316 = vmatpush1.bf16.msra.mxu0 %v292
    %317 = vmatprep.subr.bf16.mxu0 0
    %318 = vmatpush1.bf16.msra.mxu0 0
    %319 = vmatprep.subr.bf16.mxu0 0
    %320 = vmatpush1.bf16.msra.mxu0 0
    %321 = vmatprep.subr.bf16.mxu0 0
    %322 = vmatpush1.bf16.msra.mxu0 0
    %323 = vmatprep.subr.bf16.mxu0 0
    %324 = vmatpush1.bf16.msra.mxu0 0
    %325 = vmatprep.subr.bf16.mxu0 0
    %326 = vmatpush1.bf16.msra.mxu0 0
    %327 = vmatprep.subr.bf16.mxu0 0
    %328 = vmatpush1.bf16.msra.mxu0 0
    %329 = vmatprep.subr.bf16.mxu0 0
    %330 = vmatpush1.bf16.msra.mxu0 0
    %331 = vmatprep.subr.bf16.mxu0 0
    %332 = vmatpush1.bf16.msra.mxu0 0
    %333 = vmatprep.mubr.bf16.mxu0 0
    %334 = vmatmul.mubr.bf16.gmra.mrb[0].mxu0 %v251
    %v335 = vpop.f32.mrb[0].mxu0
    %v336 = vadd.f32 0.0, %v335
    %v337 = vpop.f32.mrb[0].mxu0
    %v338 = vpop.f32.mrb[0].mxu0
    %v339 = vadd.f32 0.0, %v338
    %v340 = vpop.f32.mrb[0].mxu0
    %341 = vdwg.mxu0
    %v342 = vld [vmem:[#allocation11] sm:$0xff]
    %v343 = vld [vmem:[#allocation11 + $0x8] sm:$0xff]
    %v360 = vunpack.c.l.b16 %v213
    %v361 = vunpack.c.l.b16 %v214
    %v362 = vunpack.c.l.b16 %v215
    %v363 = vunpack.c.l.b16 %v216
    %v364 = vunpack.c.l.b16 %v217
    %v365 = vunpack.c.l.b16 %v218
    %v366 = vunpack.c.l.b16 %v219
    %v367 = vunpack.c.l.b16 %v220
    %v368 = vunpack.c.l.b16 %v221
    %v369 = vunpack.c.l.b16 %v222
    %v370 = vunpack.c.l.b16 %v223
    %v371 = vunpack.c.l.b16 %v224
    %v372 = vunpack.c.l.b16 %v225
    %v373 = vunpack.c.l.b16 %v226
    %v374 = vunpack.c.l.b16 %v227
    %v375 = vunpack.c.l.b16 %v228
    %v376 = vpack.c.b16 %v361, %v360
    %v377 = vpack.c.b16 %v363, %v362
    %v378 = vpack.c.b16 %v365, %v364
    %v379 = vpack.c.b16 %v367, %v366
    %v380 = vpack.c.b16 %v369, %v368
    %v381 = vpack.c.b16 %v371, %v370
    %v382 = vpack.c.b16 %v373, %v372
    %v383 = vpack.c.b16 %v375, %v374
    %392 = vmatprep.subr.bf16.mxu0 0
    %393 = vmatpush1.bf16.msra.mxu0 %v376
    %394 = vmatprep.subr.bf16.mxu0 0
    %395 = vmatpush1.bf16.msra.mxu0 %v377
    %396 = vmatprep.subr.bf16.mxu0 0
    %397 = vmatpush1.bf16.msra.mxu0 %v378
    %398 = vmatprep.subr.bf16.mxu0 0
    %399 = vmatpush1.bf16.msra.mxu0 %v379
    %400 = vmatprep.subr.bf16.mxu0 0
    %401 = vmatpush1.bf16.msra.mxu0 %v380
    %402 = vmatprep.subr.bf16.mxu0 0
    %403 = vmatpush1.bf16.msra.mxu0 %v381
    %404 = vmatprep.subr.bf16.mxu0 0
    %405 = vmatpush1.bf16.msra.mxu0 %v382
    %406 = vmatprep.subr.bf16.mxu0 0
    %407 = vmatpush1.bf16.msra.mxu0 %v383
    %408 = vmatprep.subr.bf16.mxu0 0
    %409 = vmatpush1.bf16.msra.mxu0 0
    %410 = vmatprep.subr.bf16.mxu0 0
    %411 = vmatpush1.bf16.msra.mxu0 0
    %412 = vmatprep.subr.bf16.mxu0 0
    %413 = vmatpush1.bf16.msra.mxu0 0
    %414 = vmatprep.subr.bf16.mxu0 0
    %415 = vmatpush1.bf16.msra.mxu0 0
    %416 = vmatprep.subr.bf16.mxu0 0
    %417 = vmatpush1.bf16.msra.mxu0 0
    %418 = vmatprep.subr.bf16.mxu0 0
    %419 = vmatpush1.bf16.msra.mxu0 0
    %420 = vmatprep.subr.bf16.mxu0 0
    %421 = vmatpush1.bf16.msra.mxu0 0
    %422 = vmatprep.subr.bf16.mxu0 0
    %423 = vmatpush1.bf16.msra.mxu0 0
    %424 = vmatprep.mubr.bf16.mxu0 0
    %425 = vmatmul.mubr.bf16.gmra.mrb[0].mxu0 %v212
    %v426 = vpop.f32.mrb[0].mxu0
    %v427 = vadd.f32 %v336, %v426
    %v428 = vpop.f32.mrb[0].mxu0
    %v429 = vpop.f32.mrb[0].mxu0
    %v430 = vadd.f32 %v339, %v429
    %v431 = vpop.f32.mrb[0].mxu0
    %432 = vdwg.mxu0
    %v433 = vld [vmem:[%s5] sm:$0x1]
    %v435 = vlaneseq
    %v436 = vshrl.u32 %v435, 7
    %v437 = vsub.s32 0, %v436
    %v438 = vrot.slane %v433, %v437
    %v440 = vadd.f32 %v427, %v438
    %v441 = vadd.f32 %v430, %v438
    %v442 = vadd.f32 %v342, %v440
    %v443 = vadd.f32 %v343, %v441
    %444 = vst [vmem:[#allocation11] sm:$0xff] %v442
    %445 = vst [vmem:[#allocation11 + $0x8] sm:$0xff] %v443
    // Predicated region
    $region50: #{tpu_custom_call.1} parent=1 // pred_check
      _
    $region51: #{tpu_custom_call.1} parent=1 // pred_check_branch
      %447 = sbr.rel (0) target = $region53
    $region52: #{tpu_custom_call.1} parent=1 // pred_region
      %s449 = ssub.s32 256, 256
      %450 = vsyncadd [#allocation4], %s449
      %s451 = sshll.u32 [#allocation11], 4
      %s452 = int_to_ptr.vmem [resolvable:$true] %s451
      %457 = dma.vmem_to_hbm [thread:$0]  %s452, 256, %s6, [#allocation4], 128, 128, 8
    $region53: #{tpu_custom_call.1} parent=1 // pred_fallthru
      _
    // Predicated region
    $region54: #{tpu_custom_call.1} parent=1 // pred_check
      _
    $region55: #{tpu_custom_call.1} parent=1 // pred_check_branch
      %459 = sbr.rel (0) target = $region57
    $region56: #{tpu_custom_call.1} parent=1 // pred_region
      %460 = dma.done [#allocation4], 256
    $region57: #{tpu_custom_call.1} parent=1 // pred_fallthru
      _
    %461 = vsyncpa [#allocation3], 1
    %462 = vsyncpa [#allocation6], 1
    %463 = vsyncpa [#allocation9], 1
    %464 = vsyncpa [#allocation4], 1

</llo_original>
